<compile_context>
chip_gen: v7x
topology: tpu7x:2x2x1
jax: 0.10.0
libtpu: 0.0.40
codegen_flags: <defaults>
</compile_context>

<pallas_src>
import jax
import jax.numpy as jnp
from jax.experimental import pallas as pl
from jax.experimental.pallas import tpu as pltpu


def global_attention_kernel(h_ref, roi_ref, proi_ref, mask_ref,
                            whw_ref, whb_ref, waw_ref, wab_ref,
                            feat_ref, weight_ref):
    # wh projection for the whole batch: a single MXU push.
    ph = jnp.dot(h_ref[...], whw_ref[...],
                 preferred_element_type=jnp.float32) + whb_ref[...]          # (B, A)

    # Stacked score path: one tanh stream + one lane reduce for all B*N rows.
    # proi is ROI-major (N, B, A); ph broadcasts along the leading dim for free.
    t = jnp.tanh(proi_ref[...] + ph)                                          # (N, B, A)
    score = jnp.sum(t * waw_ref[...], axis=-1, keepdims=True) + wab_ref[...]  # (N, B, 1)

    # Fused softmax + mask + renormalize (single normalization, one divide).
    m = jnp.max(score, axis=0, keepdims=True)                                 # (1, B, 1)
    e = jnp.exp(score - m)                                                    # (N, B, 1)
    em = e * mask_ref[...]                                                    # (N, B, 1)
    denom = jnp.sum(em, axis=0, keepdims=True)                                # (1, B, 1)
    w = em * pl.reciprocal(denom, approx=False)                               # (N, B, 1)

    # Weighted ROI mix: feat[b, :] = sum_n w[n, b] * roi[n, b, :].
    feat_ref[...] = jnp.sum(w * roi_ref[...], axis=0)                         # (B, R)

    # Emit attention weights in the module's native (B, N) layout.
    n_roi = w.shape[0]
    for n in range(n_roi):              # static unroll, N is small
        weight_ref[:, n:n + 1] = w[n]                                         # (B, 1)


def prepare_params(torch_params):
    """Hoist torch-Linear layout glue out of the hot path (run once per model)."""
    A = torch_params["wh_w"].shape[0]
    return {
        "wh_w": jnp.asarray(torch_params["wh_w"], jnp.float32).T,          # (R, A)
        "wh_b": jnp.asarray(torch_params["wh_b"], jnp.float32).reshape(1, A),
        "wa_w": jnp.asarray(torch_params["wa_w"], jnp.float32).reshape(1, A),
        "wa_b": jnp.asarray(torch_params["wa_b"], jnp.float32).reshape(1, 1),
    }


def prepare_rois(roi_feats, p_roi_feats, att_masks=None):
    """ROI-major relayout (run once per image in TSSGN; ROIs/masks are fixed
    across decode steps, so the per-step call has no layout glue)."""
    B, N, _ = roi_feats.shape
    if att_masks is None:
        mask_t = jnp.ones((N, B, 1), jnp.float32)
    else:
        mask_t = jnp.transpose(att_masks.astype(jnp.float32), (1, 0)).reshape(N, B, 1)
    return {
        "roi_t": jnp.transpose(roi_feats.astype(jnp.float32), (1, 0, 2)),    # (N, B, R)
        "proi_t": jnp.transpose(p_roi_feats.astype(jnp.float32), (1, 0, 2)), # (N, B, A)
        "mask_t": mask_t,                                                    # (N, B, 1)
    }


def global_attention(h, rois, params):
    B, R = h.shape
    N = rois["roi_t"].shape[0]
    A = params["wh_w"].shape[1]

    # Advisory cost hint so XLA can schedule around this tiny, launch-bound call.
    flops = 2 * B * R * A + 4 * N * B * A + 8 * N * B + 2 * N * B * R
    transcendentals = N * B * A + N * B + B
    bytes_accessed = 4 * (B * R + N * B * R + N * B * A + N * B
                          + R * A + 3 * A + 1 + B * R + B * N)

    vmem = pl.BlockSpec(memory_space=pltpu.MemorySpace.VMEM)
    feat, weight = pl.pallas_call(
        global_attention_kernel,
        out_shape=(jax.ShapeDtypeStruct((B, R), jnp.float32),
                   jax.ShapeDtypeStruct((B, N), jnp.float32)),
        in_specs=[vmem] * 8,
        out_specs=(vmem, vmem),
        cost_estimate=pl.CostEstimate(flops=flops,
                                      transcendentals=transcendentals,
                                      bytes_accessed=bytes_accessed),
    )(h.astype(jnp.float32), rois["roi_t"], rois["proi_t"], rois["mask_t"],
      params["wh_w"], params["wh_b"], params["wa_w"], params["wa_b"])
    return feat, weight


def global_attention_ref(h, roi_feats, p_roi_feats, att_masks, torch_params):
    """Pure-JAX reference mirroring the PyTorch forward exactly."""
    ph = h @ torch_params["wh_w"].T + torch_params["wh_b"]                 # (B, A)
    dot = ph[:, None, :] + p_roi_feats                                     # (B, N, A)
    score = (jnp.tanh(dot) @ torch_params["wa_w"].T)[..., 0] + torch_params["wa_b"]
    weight = jax.nn.softmax(score, axis=1)                                 # (B, N)
    if att_masks is not None:
        weight = weight * att_masks
        weight = weight / weight.sum(axis=1, keepdims=True)
    feat = jnp.einsum("bn,bnr->br", weight, roi_feats)                     # (B, R)
    return feat, weight


if __name__ == "__main__":
    B, N, R, A = 4, 8, 32, 32   # batch, num ROIs, rnn_size, att_hid_size
    key = jax.random.PRNGKey(0)
    ks = jax.random.split(key, 8)

    h = jax.random.normal(ks[0], (B, R), jnp.float32)
    roi_feats = jax.random.normal(ks[1], (B, N, R), jnp.float32)
    p_roi_feats = jax.random.normal(ks[2], (B, N, A), jnp.float32)
    att_masks = (jax.random.uniform(ks[3], (B, N)) > 0.4).astype(jnp.float32)
    att_masks = att_masks.at[:, 0].set(1.0)   # keep every row non-empty

    torch_params = {
        "wh_w": 0.1 * jax.random.normal(ks[4], (A, R), jnp.float32),  # torch (out, in)
        "wh_b": 0.1 * jax.random.normal(ks[5], (A,), jnp.float32),
        "wa_w": 0.1 * jax.random.normal(ks[6], (1, A), jnp.float32),
        "wa_b": 0.1 * jax.random.normal(ks[7], (1,), jnp.float32),
    }

    params = prepare_params(torch_params)                    # once per model
    rois = prepare_rois(roi_feats, p_roi_feats, att_masks)   # once per image

    # masked path
    feat, weight = global_attention(h, rois, params)
    jax.block_until_ready((feat, weight))
    feat_ref, weight_ref = global_attention_ref(h, roi_feats, p_roi_feats,
                                                att_masks, torch_params)
    assert jnp.allclose(feat, feat_ref, atol=2e-5, rtol=2e-5), "feat mismatch (masked)"
    assert jnp.allclose(weight, weight_ref, atol=2e-5, rtol=2e-5), "weight mismatch (masked)"

    # att_masks=None path (plain softmax)
    rois_nm = prepare_rois(roi_feats, p_roi_feats, None)
    feat2, weight2 = global_attention(h, rois_nm, params)
    jax.block_until_ready((feat2, weight2))
    feat_ref2, weight_ref2 = global_attention_ref(h, roi_feats, p_roi_feats,
                                                  None, torch_params)
    assert jnp.allclose(feat2, feat_ref2, atol=2e-5, rtol=2e-5), "feat mismatch (no mask)"
    assert jnp.allclose(weight2, weight_ref2, atol=2e-5, rtol=2e-5), "weight mismatch (no mask)"

    print("KERNEL_OK")
</pallas_src>

<mosaic_0001>
module attributes {stable_mosaic.version = 11 : i64} {
  func.func @global_attention_kernel(%arg0: memref<4x32xf32, #tpu.memory_space<vmem>>, %arg1: memref<8x4x32xf32, #tpu.memory_space<vmem>>, %arg2: memref<8x4x32xf32, #tpu.memory_space<vmem>>, %arg3: memref<8x4x1xf32, #tpu.memory_space<vmem>>, %arg4: memref<32x32xf32, #tpu.memory_space<vmem>>, %arg5: memref<1x32xf32, #tpu.memory_space<vmem>>, %arg6: memref<1x32xf32, #tpu.memory_space<vmem>>, %arg7: memref<1x1xf32, #tpu.memory_space<vmem>>, %arg8: memref<4x32xf32, #tpu.memory_space<vmem>>, %arg9: memref<4x8xf32, #tpu.memory_space<vmem>>) attributes {dimension_semantics = [], scalar_prefetch = 0 : i64, scratch_operands = 0 : i64, tpu.core_type = #tpu.core_type<tc>} {
    %c0 = arith.constant 0 : index
    %c0_0 = arith.constant 0 : index
    %0 = vector.load %arg0[%c0, %c0_0] : memref<4x32xf32, #tpu.memory_space<vmem>>, vector<4x32xf32>
    %c0_1 = arith.constant 0 : index
    %c0_2 = arith.constant 0 : index
    %1 = vector.load %arg4[%c0_1, %c0_2] : memref<32x32xf32, #tpu.memory_space<vmem>>, vector<32x32xf32>
    %cst = arith.constant dense<0.000000e+00> : vector<4x32xf32>
    %2 = tpu.matmul %0, %1, %cst {dimension_numbers = #tpu.dot_dimension_numbers<[1], [0], [0], [1], [0, 0, 1, 1], [], []>} : vector<4x32xf32>, vector<32x32xf32>, vector<4x32xf32> -> vector<4x32xf32>
    %c0_3 = arith.constant 0 : index
    %c0_4 = arith.constant 0 : index
    %3 = vector.load %arg5[%c0_3, %c0_4] : memref<1x32xf32, #tpu.memory_space<vmem>>, vector<1x32xf32>
    %4 = vector.broadcast %3 : vector<1x32xf32> to vector<4x32xf32>
    %5 = arith.addf %2, %4 : vector<4x32xf32>
    %c0_5 = arith.constant 0 : index
    %c0_6 = arith.constant 0 : index
    %c0_7 = arith.constant 0 : index
    %6 = vector.load %arg2[%c0_5, %c0_6, %c0_7] : memref<8x4x32xf32, #tpu.memory_space<vmem>>, vector<8x4x32xf32>
    %7 = vector.shape_cast %5 : vector<4x32xf32> to vector<1x4x32xf32>
    %8 = vector.broadcast %7 : vector<1x4x32xf32> to vector<8x4x32xf32>
    %9 = arith.addf %6, %8 : vector<8x4x32xf32>
    %10 = math.tanh %9 : vector<8x4x32xf32>
    %c0_8 = arith.constant 0 : index
    %c0_9 = arith.constant 0 : index
    %11 = vector.load %arg6[%c0_8, %c0_9] : memref<1x32xf32, #tpu.memory_space<vmem>>, vector<1x32xf32>
    %12 = vector.shape_cast %11 : vector<1x32xf32> to vector<1x1x32xf32>
    %13 = vector.broadcast %12 : vector<1x1x32xf32> to vector<8x4x32xf32>
    %14 = arith.mulf %10, %13 : vector<8x4x32xf32>
    %cst_10 = arith.constant dense<0.000000e+00> : vector<8x4xf32>
    %15 = vector.multi_reduction <add>, %14, %cst_10 [2] : vector<8x4x32xf32> to vector<8x4xf32>
    %16 = vector.shape_cast %15 : vector<8x4xf32> to vector<8x4x1xf32>
    %c0_11 = arith.constant 0 : index
    %c0_12 = arith.constant 0 : index
    %17 = vector.load %arg7[%c0_11, %c0_12] : memref<1x1xf32, #tpu.memory_space<vmem>>, vector<1x1xf32>
    %18 = vector.shape_cast %17 : vector<1x1xf32> to vector<1x1x1xf32>
    %19 = vector.broadcast %18 : vector<1x1x1xf32> to vector<8x4x1xf32>
    %20 = arith.addf %16, %19 : vector<8x4x1xf32>
    %cst_13 = arith.constant dense<0xFF800000> : vector<4x1xf32>
    %21 = vector.multi_reduction <maximumf>, %20, %cst_13 [0] : vector<8x4x1xf32> to vector<4x1xf32>
    %22 = vector.shape_cast %21 : vector<4x1xf32> to vector<1x4x1xf32>
    %23 = vector.broadcast %22 : vector<1x4x1xf32> to vector<8x4x1xf32>
    %24 = arith.subf %20, %23 : vector<8x4x1xf32>
    %25 = math.exp %24 : vector<8x4x1xf32>
    %c0_14 = arith.constant 0 : index
    %c0_15 = arith.constant 0 : index
    %c0_16 = arith.constant 0 : index
    %26 = vector.load %arg3[%c0_14, %c0_15, %c0_16] : memref<8x4x1xf32, #tpu.memory_space<vmem>>, vector<8x4x1xf32>
    %27 = arith.mulf %25, %26 : vector<8x4x1xf32>
    %cst_17 = arith.constant dense<0.000000e+00> : vector<4x1xf32>
    %28 = vector.multi_reduction <add>, %27, %cst_17 [0] : vector<8x4x1xf32> to vector<4x1xf32>
    %29 = vector.shape_cast %28 : vector<4x1xf32> to vector<1x4x1xf32>
    %30 = tpu.reciprocal %29 : vector<1x4x1xf32> -> vector<1x4x1xf32>
    %31 = vector.broadcast %30 : vector<1x4x1xf32> to vector<8x4x1xf32>
    %32 = arith.mulf %27, %31 : vector<8x4x1xf32>
    %c0_18 = arith.constant 0 : index
    %c0_19 = arith.constant 0 : index
    %c0_20 = arith.constant 0 : index
    %33 = vector.load %arg1[%c0_18, %c0_19, %c0_20] : memref<8x4x32xf32, #tpu.memory_space<vmem>>, vector<8x4x32xf32>
    %34 = vector.broadcast %32 : vector<8x4x1xf32> to vector<8x4x32xf32>
    %35 = arith.mulf %34, %33 : vector<8x4x32xf32>
    %cst_21 = arith.constant dense<0.000000e+00> : vector<4x32xf32>
    %36 = vector.multi_reduction <add>, %35, %cst_21 [0] : vector<8x4x32xf32> to vector<4x32xf32>
    %c0_22 = arith.constant 0 : index
    %c0_23 = arith.constant 0 : index
    %37 = vector.load %arg8[%c0_22, %c0_23] : memref<4x32xf32, #tpu.memory_space<vmem>>, vector<4x32xf32>
    tpu.vector_store %arg8[%c0_22, %c0_23], %36 {strides = array<i32>} : memref<4x32xf32, #tpu.memory_space<vmem>>, vector<4x32xf32>,
    %38 = vector.extract_strided_slice %32 {offsets = [0, 0, 0], sizes = [1, 4, 1], strides = [1, 1, 1]} : vector<8x4x1xf32> to vector<1x4x1xf32>
    %39 = vector.shape_cast %38 : vector<1x4x1xf32> to vector<4x1xf32>
    %c0_24 = arith.constant 0 : index
    %c0_25 = arith.constant 0 : index
    %40 = vector.load %arg9[%c0_24, %c0_25] : memref<4x8xf32, #tpu.memory_space<vmem>>, vector<4x1xf32>
    tpu.vector_store %arg9[%c0_24, %c0_25], %39 {strides = array<i32>} : memref<4x8xf32, #tpu.memory_space<vmem>>, vector<4x1xf32>,
    %41 = vector.extract_strided_slice %32 {offsets = [1, 0, 0], sizes = [1, 4, 1], strides = [1, 1, 1]} : vector<8x4x1xf32> to vector<1x4x1xf32>
    %42 = vector.shape_cast %41 : vector<1x4x1xf32> to vector<4x1xf32>
    %c0_26 = arith.constant 0 : index
    %c1 = arith.constant 1 : index
    %43 = vector.load %arg9[%c0_26, %c1] : memref<4x8xf32, #tpu.memory_space<vmem>>, vector<4x1xf32>
    tpu.vector_store %arg9[%c0_26, %c1], %42 {strides = array<i32>} : memref<4x8xf32, #tpu.memory_space<vmem>>, vector<4x1xf32>,
    %44 = vector.extract_strided_slice %32 {offsets = [2, 0, 0], sizes = [1, 4, 1], strides = [1, 1, 1]} : vector<8x4x1xf32> to vector<1x4x1xf32>
    %45 = vector.shape_cast %44 : vector<1x4x1xf32> to vector<4x1xf32>
    %c0_27 = arith.constant 0 : index
    %c2 = arith.constant 2 : index
    %46 = vector.load %arg9[%c0_27, %c2] : memref<4x8xf32, #tpu.memory_space<vmem>>, vector<4x1xf32>
    tpu.vector_store %arg9[%c0_27, %c2], %45 {strides = array<i32>} : memref<4x8xf32, #tpu.memory_space<vmem>>, vector<4x1xf32>,
    %47 = vector.extract_strided_slice %32 {offsets = [3, 0, 0], sizes = [1, 4, 1], strides = [1, 1, 1]} : vector<8x4x1xf32> to vector<1x4x1xf32>
    %48 = vector.shape_cast %47 : vector<1x4x1xf32> to vector<4x1xf32>
    %c0_28 = arith.constant 0 : index
    %c3 = arith.constant 3 : index
    %49 = vector.load %arg9[%c0_28, %c3] : memref<4x8xf32, #tpu.memory_space<vmem>>, vector<4x1xf32>
    tpu.vector_store %arg9[%c0_28, %c3], %48 {strides = array<i32>} : memref<4x8xf32, #tpu.memory_space<vmem>>, vector<4x1xf32>,
    %50 = vector.extract_strided_slice %32 {offsets = [4, 0, 0], sizes = [1, 4, 1], strides = [1, 1, 1]} : vector<8x4x1xf32> to vector<1x4x1xf32>
    %51 = vector.shape_cast %50 : vector<1x4x1xf32> to vector<4x1xf32>
    %c0_29 = arith.constant 0 : index
    %c4 = arith.constant 4 : index
    %52 = vector.load %arg9[%c0_29, %c4] : memref<4x8xf32, #tpu.memory_space<vmem>>, vector<4x1xf32>
    tpu.vector_store %arg9[%c0_29, %c4], %51 {strides = array<i32>} : memref<4x8xf32, #tpu.memory_space<vmem>>, vector<4x1xf32>,
    %53 = vector.extract_strided_slice %32 {offsets = [5, 0, 0], sizes = [1, 4, 1], strides = [1, 1, 1]} : vector<8x4x1xf32> to vector<1x4x1xf32>
    %54 = vector.shape_cast %53 : vector<1x4x1xf32> to vector<4x1xf32>
    %c0_30 = arith.constant 0 : index
    %c5 = arith.constant 5 : index
    %55 = vector.load %arg9[%c0_30, %c5] : memref<4x8xf32, #tpu.memory_space<vmem>>, vector<4x1xf32>
    tpu.vector_store %arg9[%c0_30, %c5], %54 {strides = array<i32>} : memref<4x8xf32, #tpu.memory_space<vmem>>, vector<4x1xf32>,
    %56 = vector.extract_strided_slice %32 {offsets = [6, 0, 0], sizes = [1, 4, 1], strides = [1, 1, 1]} : vector<8x4x1xf32> to vector<1x4x1xf32>
    %57 = vector.shape_cast %56 : vector<1x4x1xf32> to vector<4x1xf32>
    %c0_31 = arith.constant 0 : index
    %c6 = arith.constant 6 : index
    %58 = vector.load %arg9[%c0_31, %c6] : memref<4x8xf32, #tpu.memory_space<vmem>>, vector<4x1xf32>
    tpu.vector_store %arg9[%c0_31, %c6], %57 {strides = array<i32>} : memref<4x8xf32, #tpu.memory_space<vmem>>, vector<4x1xf32>,
    %59 = vector.extract_strided_slice %32 {offsets = [7, 0, 0], sizes = [1, 4, 1], strides = [1, 1, 1]} : vector<8x4x1xf32> to vector<1x4x1xf32>
    %60 = vector.shape_cast %59 : vector<1x4x1xf32> to vector<4x1xf32>
    %c0_32 = arith.constant 0 : index
    %c7 = arith.constant 7 : index
    %61 = vector.load %arg9[%c0_32, %c7] : memref<4x8xf32, #tpu.memory_space<vmem>>, vector<4x1xf32>
    tpu.vector_store %arg9[%c0_32, %c7], %60 {strides = array<i32>} : memref<4x8xf32, #tpu.memory_space<vmem>>, vector<4x1xf32>,
    return
  }
}

</mosaic_0001>

<llo_original>
// kernel: tpu_custom_call.1
$region0: #{tpu_custom_call.1}
  #allocation0 [shape = 'u32[]', space=smem, size = 0x4, offset = 0x4, fixed_abs, tag = 'smem constant byte address 0x4 - core index']
  #allocation1 [shape = 'u32[144,128]{1,0:T(1,128)}', space=vmem, size = 0x12000, scoped, tag = 'internal scratch']
  #allocation2 [shape = 'f32[1,1]{1,0:T(1,128)S(1)}', space=vmem, size = 0x200, scoped, tag = 'scoped memory for tpu_custom_call.1']
  %s0 = inlined_call_operand.vmem [shape: f32[4,32], index: 0, kind: input, shape index: {}]
  %s1 = inlined_call_operand.vmem [shape: f32[8,4,32], index: 1, kind: input, shape index: {}]
  %s2 = inlined_call_operand.hbm [shape: f32[8,4,32], index: 2, kind: input, shape index: {}]
  %s3 = inlined_call_operand.vmem [shape: f32[8,4,1], index: 3, kind: input, shape index: {}]
  %s4 = inlined_call_operand.hbm [shape: f32[32,32], index: 4, kind: input, shape index: {}]
  %s5 = inlined_call_operand.vmem [shape: f32[1,32], index: 5, kind: input, shape index: {}]
  %s6 = inlined_call_operand.vmem [shape: f32[1,32], index: 6, kind: input, shape index: {}]
  %s7 = inlined_call_operand.<no memory space> [shape: f32[1,1], index: 7, kind: input, shape index: {}]
  %s8 = inlined_call_operand.hbm [shape: f32[4,32], index: 8, kind: output, shape index: {0}]
  %s9 = inlined_call_operand.hbm [shape: f32[4,8], index: 9, kind: output, shape index: {1}]
  %10 = xla_tuple %s8, %s9
  %s11 = sld [smem:[#allocation0]]
  $region58: #{tpu_custom_call.1} parent=0
    _
  %s13 = ssub.s32 1, %s11
  %s14 = scalar_select 0, %s13, %s11
  %v15 = vstv %s7
  %16 = vst [vmem:[#allocation2] sm:$0x1] %v15
  $region1: #{tpu_custom_call.1} parent=0
    #allocation3 [shape = 'u8[16384]{0}', space=vmem, size = 0x4000, scoped, tag = 'input window, operand 2, single buffered']
    #allocation4 [shape = 's32[1]{0}', space=sflag, size = 0x4, scoped, tag = 'scoped memory for tpu_custom_call.1']
    #allocation5 [shape = 's32[1]{0}', space=sflag, size = 0x4, scoped, tag = 'scoped memory for tpu_custom_call.1']
    #allocation6 [shape = 'u8[16384]{0}', space=vmem, size = 0x4000, scoped, tag = 'input window, operand 4, single buffered']
    #allocation7 [shape = 's32[1]{0}', space=sflag, size = 0x4, scoped, tag = 'scoped memory for tpu_custom_call.1']
    #allocation8 [shape = 'u8[2048]{0}', space=vmem, size = 0x800, scoped, tag = 'output window, operand 0, single buffered']
    #allocation9 [shape = 'u8[2048]{0}', space=vmem, size = 0x800, scoped, tag = 'output window, operand 1, single buffered']
    #allocation10 [shape = 's32[1]{0}', space=sflag, size = 0x4, scoped, tag = 'scoped memory for tpu_custom_call.1']
    %17 = vsyncpa [#allocation4], 0
    %18 = vsyncpa [#allocation7], 0
    %19 = vsyncpa [#allocation5], 0
    %20 = vsyncpa [#allocation10], 0
    // Predicated region
    $region2: #{tpu_custom_call.1} parent=1 // pred_check
      _
    $region3: #{tpu_custom_call.1} parent=1 // pred_check_branch
      %22 = sbr.rel (0) target = $region5
    $region4: #{tpu_custom_call.1} parent=1 // pred_region
      _
    $region5: #{tpu_custom_call.1} parent=1 // pred_fallthru
      _
    // Predicated region
    $region6: #{tpu_custom_call.1} parent=1 // pred_check
      _
    $region7: #{tpu_custom_call.1} parent=1 // pred_check_branch
      %24 = sbr.rel (0) target = $region9
    $region8: #{tpu_custom_call.1} parent=1 // pred_region
      _
    $region9: #{tpu_custom_call.1} parent=1 // pred_fallthru
      _
    // Predicated region
    $region10: #{tpu_custom_call.1} parent=1 // pred_check
      _
    $region11: #{tpu_custom_call.1} parent=1 // pred_check_branch
      %26 = sbr.rel (0) target = $region13
    $region12: #{tpu_custom_call.1} parent=1 // pred_region
      %s28 = ssub.s32 512, 512
      %29 = vsyncadd [#allocation4], %s28
      %s30 = sshll.u32 [#allocation3], 4
      %s31 = int_to_ptr.vmem [resolvable:$true] %s30
      %36 = dma.hbm_to_vmem [thread:$0]  %s2, 512, %s31, [#allocation4], 64, 64, 4
    $region13: #{tpu_custom_call.1} parent=1 // pred_fallthru
      _
    // Predicated region
    $region14: #{tpu_custom_call.1} parent=1 // pred_check
      _
    $region15: #{tpu_custom_call.1} parent=1 // pred_check_branch
      %38 = sbr.rel (0) target = $region17
    $region16: #{tpu_custom_call.1} parent=1 // pred_region
      _
    $region17: #{tpu_custom_call.1} parent=1 // pred_fallthru
      _
    // Predicated region
    $region18: #{tpu_custom_call.1} parent=1 // pred_check
      _
    $region19: #{tpu_custom_call.1} parent=1 // pred_check_branch
      %40 = sbr.rel (0) target = $region21
    $region20: #{tpu_custom_call.1} parent=1 // pred_region
      %s42 = ssub.s32 512, 512
      %43 = vsyncadd [#allocation7], %s42
      %s44 = sshll.u32 [#allocation6], 4
      %s45 = int_to_ptr.vmem [resolvable:$true] %s44
      %50 = dma.hbm_to_vmem [thread:$0]  %s4, 512, %s45, [#allocation7], 128, 128, 8
    $region21: #{tpu_custom_call.1} parent=1 // pred_fallthru
      _
    // Predicated region
    $region22: #{tpu_custom_call.1} parent=1 // pred_check
      _
    $region23: #{tpu_custom_call.1} parent=1 // pred_check_branch
      %52 = sbr.rel (0) target = $region25
    $region24: #{tpu_custom_call.1} parent=1 // pred_region
      _
    $region25: #{tpu_custom_call.1} parent=1 // pred_fallthru
      _
    // Predicated region
    $region26: #{tpu_custom_call.1} parent=1 // pred_check
      _
    $region27: #{tpu_custom_call.1} parent=1 // pred_check_branch
      %54 = sbr.rel (0) target = $region29
    $region28: #{tpu_custom_call.1} parent=1 // pred_region
      _
    $region29: #{tpu_custom_call.1} parent=1 // pred_fallthru
      _
    // Predicated region
    $region30: #{tpu_custom_call.1} parent=1 // pred_check
      _
    $region31: #{tpu_custom_call.1} parent=1 // pred_check_branch
      %56 = sbr.rel (0) target = $region33
    $region32: #{tpu_custom_call.1} parent=1 // pred_region
      _
    $region33: #{tpu_custom_call.1} parent=1 // pred_fallthru
      _
    // Predicated region
    $region34: #{tpu_custom_call.1} parent=1 // pred_check
      _
    $region35: #{tpu_custom_call.1} parent=1 // pred_check_branch
      %58 = sbr.rel (0) target = $region37
    $region36: #{tpu_custom_call.1} parent=1 // pred_region
      %59 = dma.done [#allocation4], 512
    $region37: #{tpu_custom_call.1} parent=1 // pred_fallthru
      _
    // Predicated region
    $region38: #{tpu_custom_call.1} parent=1 // pred_check
      _
    $region39: #{tpu_custom_call.1} parent=1 // pred_check_branch
      %61 = sbr.rel (0) target = $region41
    $region40: #{tpu_custom_call.1} parent=1 // pred_region
      %62 = dma.done [#allocation7], 512
    $region41: #{tpu_custom_call.1} parent=1 // pred_fallthru
      _
    %v63 = vld [vmem:[%s0] sm:$0xf]
    %v64 = vld [vmem:[#allocation6] sm:$0xff]
    %v65 = vld [vmem:[#allocation6 + $0x8] sm:$0xff]
    %v66 = vld [vmem:[#allocation6 + $0x10] sm:$0xff]
    %v67 = vld [vmem:[#allocation6 + $0x18] sm:$0xff]
    %v68 = vld [vmem:[%s5] sm:$0x1]
    %v70 = vlaneseq
    %v71 = vshrl.u32 %v70, 7
    %v72 = vsub.s32 0, %v71
    %v73 = vrot.slane %v68, %v72
    %vm75 = vcmask 261120
    %v77 = vsel %vm75, %v63, 0
    %79 = vmatprep.subr.mxu0 0.0
    %80 = vmatpush1.msra.mxu0 %v64
    %81 = vmatprep.subr.mxu0 0.0
    %82 = vmatpush1.msra.mxu0 %v65
    %83 = vmatprep.subr.mxu0 0.0
    %84 = vmatpush1.msra.mxu0 %v66
    %85 = vmatprep.subr.mxu0 0.0
    %86 = vmatpush1.msra.mxu0 %v67
    %87 = vmatprep.subr.mxu0 0.0
    %88 = vmatpush1.msra.mxu0 0.0
    %89 = vmatprep.subr.mxu0 0.0
    %90 = vmatpush1.msra.mxu0 0.0
    %91 = vmatprep.subr.mxu0 0.0
    %92 = vmatpush1.msra.mxu0 0.0
    %93 = vmatprep.subr.mxu0 0.0
    %94 = vmatpush1.msra.mxu0 0.0
    %95 = vmatprep.subr.mxu0 0.0
    %96 = vmatpush1.msra.mxu0 0.0
    %97 = vmatprep.subr.mxu0 0.0
    %98 = vmatpush1.msra.mxu0 0.0
    %99 = vmatprep.subr.mxu0 0.0
    %100 = vmatpush1.msra.mxu0 0.0
    %101 = vmatprep.subr.mxu0 0.0
    %102 = vmatpush1.msra.mxu0 0.0
    %103 = vmatprep.subr.mxu0 0.0
    %104 = vmatpush1.msra.mxu0 0.0
    %105 = vmatprep.subr.mxu0 0.0
    %106 = vmatpush1.msra.mxu0 0.0
    %107 = vmatprep.subr.mxu0 0.0
    %108 = vmatpush1.msra.mxu0 0.0
    %109 = vmatprep.subr.mxu0 0.0
    %110 = vmatpush1.msra.mxu0 0.0
    %111 = vmatprep.subr.mxu0 0.0
    %112 = vmatpush1.msra.mxu0 0.0
    %113 = vmatprep.subr.mxu0 0.0
    %114 = vmatpush1.msra.mxu0 0.0
    %115 = vmatprep.subr.mxu0 0.0
    %116 = vmatpush1.msra.mxu0 0.0
    %117 = vmatprep.subr.mxu0 0.0
    %118 = vmatpush1.msra.mxu0 0.0
    %119 = vmatprep.subr.mxu0 0.0
    %120 = vmatpush1.msra.mxu0 0.0
    %121 = vmatprep.subr.mxu0 0.0
    %122 = vmatpush1.msra.mxu0 0.0
    %123 = vmatprep.subr.mxu0 0.0
    %124 = vmatpush1.msra.mxu0 0.0
    %125 = vmatprep.subr.mxu0 0.0
    %126 = vmatpush1.msra.mxu0 0.0
    %127 = vmatprep.subr.mxu0 0.0
    %128 = vmatpush1.msra.mxu0 0.0
    %129 = vmatprep.subr.mxu0 0.0
    %130 = vmatpush1.msra.mxu0 0.0
    %131 = vmatprep.subr.mxu0 0.0
    %132 = vmatpush1.msra.mxu0 0.0
    %133 = vmatprep.subr.mxu0 0.0
    %134 = vmatpush1.msra.mxu0 0.0
    %135 = vmatprep.subr.mxu0 0.0
    %136 = vmatpush1.msra.mxu0 0.0
    %137 = vmatprep.subr.mxu0 0.0
    %138 = vmatpush1.msra.mxu0 0.0
    %139 = vmatprep.subr.mxu0 0.0
    %140 = vmatpush1.msra.mxu0 0.0
    %141 = vmatprep.subr.mxu0 0.0
    %142 = vmatpush1.msra.mxu0 0.0
    %143 = vmatprep.mubr.f32.mxu0 0.0
    %144 = vmatmul.mubr.f32.gmra.mrb[0].mxu0 %v77
    %v145 = vpop.f32.mrb[0].mxu0
    %v146 = vadd.f32 %v73, %v145
    %v147 = vpop.f32.mrb[0].mxu0
    %148 = vdwg.mxu0
    %v149 = vld [vmem:[#allocation3] sm:$0xf]
    %v150 = vld [vmem:[#allocation3 + $0x4] sm:$0xf]
    %v151 = vld [vmem:[#allocation3 + $0x8] sm:$0xf]
    %v152 = vld [vmem:[#allocation3 + $0xc] sm:$0xf]
    %v153 = vld [vmem:[#allocation3 + $0x10] sm:$0xf]
    %v154 = vld [vmem:[#allocation3 + $0x14] sm:$0xf]
    %v155 = vld [vmem:[#allocation3 + $0x18] sm:$0xf]
    %v156 = vld [vmem:[#allocation3 + $0x1c] sm:$0xf]
    %v157 = vadd.f32 %v149, %v146
    %v158 = vadd.f32 %v150, %v146
    %v159 = vadd.f32 %v151, %v146
    %v160 = vadd.f32 %v152, %v146
    %v161 = vadd.f32 %v153, %v146
    %v162 = vadd.f32 %v154, %v146
    %v163 = vadd.f32 %v155, %v146
    %v164 = vadd.f32 %v156, %v146
    %v165 = vtanh.pop %v157
    %v166 = vtanh.pop %v158
    %v167 = vtanh.pop %v159
    %v168 = vtanh.pop %v160
    %v169 = vtanh.pop %v161
    %v170 = vtanh.pop %v162
    %v171 = vtanh.pop %v163
    %v172 = vtanh.pop %v164
    %v173 = vld [vmem:[%s6] sm:$0x1]
    %v175 = vlaneseq
    %v176 = vshrl.u32 %v175, 7
    %v177 = vsub.s32 0, %v176
    %v178 = vrot.slane %v173, %v177
    %v180 = vmul.f32 %v165, %v178
    %v181 = vmul.f32 %v166, %v178
    %v182 = vmul.f32 %v167, %v178
    %v183 = vmul.f32 %v168, %v178
    %v184 = vmul.f32 %v169, %v178
    %v185 = vmul.f32 %v170, %v178
    %v186 = vmul.f32 %v171, %v178
    %v187 = vmul.f32 %v172, %v178
    %vm188 = vcmask 257024
    %v189 = vsel %vm188, %v180, 0.0
    %190 = vadd.xlane.f32.xlu0 %v189
    %v191 = vpop.xlane.xlu0 %190
    %v192 = vsel %vm188, %v181, 0.0
    %193 = vadd.xlane.f32.xlu0 %v192
    %v194 = vpop.xlane.xlu0 %193
    %v195 = vsel %vm188, %v182, 0.0
    %196 = vadd.xlane.f32.xlu0 %v195
    %v197 = vpop.xlane.xlu0 %196
    %v198 = vsel %vm188, %v183, 0.0
    %199 = vadd.xlane.f32.xlu0 %v198
    %v200 = vpop.xlane.xlu0 %199
    %v201 = vsel %vm188, %v184, 0.0
    %202 = vadd.xlane.f32.xlu0 %v201
    %v203 = vpop.xlane.xlu0 %202
    %v204 = vsel %vm188, %v185, 0.0
    %205 = vadd.xlane.f32.xlu0 %v204
    %v206 = vpop.xlane.xlu0 %205
    %v207 = vsel %vm188, %v186, 0.0
    %208 = vadd.xlane.f32.xlu0 %v207
    %v209 = vpop.xlane.xlu0 %208
    %v210 = vsel %vm188, %v187, 0.0
    %211 = vadd.xlane.f32.xlu0 %v210
    %v212 = vpop.xlane.xlu0 %211
    %v213 = vld [vmem:[#allocation2] sm:$0x1]
    %v215 = vlaneseq
    %v216 = vshrl.u32 %v215, 7
    %v217 = vsub.s32 0, %v216
    %v218 = vrot.slane %v213, %v217
    %v220 = vadd.f32 %v191, %v218
    %v221 = vadd.f32 %v194, %v218
    %v222 = vadd.f32 %v197, %v218
    %v223 = vadd.f32 %v200, %v218
    %v224 = vadd.f32 %v203, %v218
    %v225 = vadd.f32 %v206, %v218
    %v226 = vadd.f32 %v209, %v218
    %v227 = vadd.f32 %v212, %v218
    %vm228 = vcmask 3072
    %v229 = vsel %vm228, %v220, -inf
    %v230 = vsel %vm228, %v221, -inf
    %v231 = vsel %vm228, %v222, -inf
    %v232 = vsel %vm228, %v223, -inf
    %v233 = vsel %vm228, %v224, -inf
    %v234 = vmax.f32 %v229, %v233
    %v235 = vsel %vm228, %v225, -inf
    %v236 = vmax.f32 %v230, %v235
    %v237 = vsel %vm228, %v226, -inf
    %v238 = vmax.f32 %v231, %v237
    %v239 = vsel %vm228, %v227, -inf
    %v240 = vmax.f32 %v232, %v239
    %v241 = vmax.f32 %v234, %v236
    %v242 = vmax.f32 %v238, %v240
    %v243 = vmax.f32 %v241, %v242
    %v244 = vsub.f32 %v220, %v243
    %v245 = vsub.f32 %v221, %v243
    %v246 = vsub.f32 %v222, %v243
    %v247 = vsub.f32 %v223, %v243
    %v248 = vsub.f32 %v224, %v243
    %v249 = vsub.f32 %v225, %v243
    %v250 = vsub.f32 %v226, %v243
    %v251 = vsub.f32 %v227, %v243
    %v252 = vmul.f32 %v244, 1.442695
    %v253 = vpow.pop %v252
    %v254 = vmul.f32 %v245, 1.442695
    %v255 = vpow.pop %v254
    %v256 = vmul.f32 %v246, 1.442695
    %v257 = vpow.pop %v256
    %v258 = vmul.f32 %v247, 1.442695
    %v259 = vpow.pop %v258
    %v260 = vmul.f32 %v248, 1.442695
    %v261 = vpow.pop %v260
    %v262 = vmul.f32 %v249, 1.442695
    %v263 = vpow.pop %v262
    %v264 = vmul.f32 %v250, 1.442695
    %v265 = vpow.pop %v264
    %v266 = vmul.f32 %v251, 1.442695
    %v267 = vpow.pop %v266
    %v268 = vld [vmem:[%s3] sm:$0xf]
    %v269 = vld [vmem:[%s3 + $0x4] sm:$0xf]
    %v270 = vld [vmem:[%s3 + $0x8] sm:$0xf]
    %v271 = vld [vmem:[%s3 + $0xc] sm:$0xf]
    %v272 = vld [vmem:[%s3 + $0x10] sm:$0xf]
    %v273 = vld [vmem:[%s3 + $0x14] sm:$0xf]
    %v274 = vld [vmem:[%s3 + $0x18] sm:$0xf]
    %v275 = vld [vmem:[%s3 + $0x1c] sm:$0xf]
    %v276 = vmul.f32 %v253, %v268
    %v277 = vmul.f32 %v255, %v269
    %v278 = vmul.f32 %v257, %v270
    %v279 = vmul.f32 %v259, %v271
    %v280 = vmul.f32 %v261, %v272
    %v281 = vmul.f32 %v263, %v273
    %v282 = vmul.f32 %v265, %v274
    %v283 = vmul.f32 %v267, %v275
    %v284 = vsel %vm228, %v276, 0.0
    %v285 = vsel %vm228, %v277, 0.0
    %v286 = vadd.f32 %v284, %v285
    %v287 = vsel %vm228, %v278, 0.0
    %v288 = vadd.f32 %v286, %v287
    %v289 = vsel %vm228, %v279, 0.0
    %v290 = vadd.f32 %v288, %v289
    %v291 = vsel %vm228, %v280, 0.0
    %v292 = vadd.f32 %v290, %v291
    %v293 = vsel %vm228, %v281, 0.0
    %v294 = vadd.f32 %v292, %v293
    %v295 = vsel %vm228, %v282, 0.0
    %v296 = vadd.f32 %v294, %v295
    %v297 = vsel %vm228, %v283, 0.0
    %v298 = vadd.f32 %v296, %v297
    %v299 = vrcp.pop %v298
    %v300 = vmul.f32 %v276, %v299
    %v301 = vmul.f32 %v277, %v299
    %v302 = vmul.f32 %v278, %v299
    %v303 = vmul.f32 %v279, %v299
    %v304 = vmul.f32 %v280, %v299
    %v305 = vmul.f32 %v281, %v299
    %v306 = vmul.f32 %v282, %v299
    %v307 = vmul.f32 %v283, %v299
    %v308 = vld [vmem:[%s1] sm:$0xf]
    %v309 = vld [vmem:[%s1 + $0x4] sm:$0xf]
    %v310 = vld [vmem:[%s1 + $0x8] sm:$0xf]
    %v311 = vld [vmem:[%s1 + $0xc] sm:$0xf]
    %v312 = vld [vmem:[%s1 + $0x10] sm:$0xf]
    %v313 = vld [vmem:[%s1 + $0x14] sm:$0xf]
    %v314 = vld [vmem:[%s1 + $0x18] sm:$0xf]
    %v315 = vld [vmem:[%s1 + $0x1c] sm:$0xf]
    %317 = vset.pattern.permute.xlu0 0
    %318 = vperm.xlu0 %317, %v300
    %v319 = vpop.permute.xlu0 %318
    %322 = vset.pattern.permute.xlu0 0
    %323 = vperm.xlu0 %322, %v301
    %v324 = vpop.permute.xlu0 %323
    %327 = vset.pattern.permute.xlu0 0
    %328 = vperm.xlu0 %327, %v302
    %v329 = vpop.permute.xlu0 %328
    %332 = vset.pattern.permute.xlu0 0
    %333 = vperm.xlu0 %332, %v303
    %v334 = vpop.permute.xlu0 %333
    %337 = vset.pattern.permute.xlu0 0
    %338 = vperm.xlu0 %337, %v304
    %v339 = vpop.permute.xlu0 %338
    %342 = vset.pattern.permute.xlu0 0
    %343 = vperm.xlu0 %342, %v305
    %v344 = vpop.permute.xlu0 %343
    %347 = vset.pattern.permute.xlu0 0
    %348 = vperm.xlu0 %347, %v306
    %v349 = vpop.permute.xlu0 %348
    %352 = vset.pattern.permute.xlu0 0
    %353 = vperm.xlu0 %352, %v307
    %v354 = vpop.permute.xlu0 %353
    %v356 = vmul.f32 %v319, %v308
    %v357 = vmul.f32 %v324, %v309
    %v358 = vmul.f32 %v329, %v310
    %v359 = vmul.f32 %v334, %v311
    %v360 = vmul.f32 %v339, %v312
    %v361 = vmul.f32 %v344, %v313
    %v362 = vmul.f32 %v349, %v314
    %v363 = vmul.f32 %v354, %v315
    %v364 = vsel %vm188, %v356, 0.0
    %v365 = vsel %vm188, %v357, 0.0
    %v366 = vadd.f32 %v364, %v365
    %v367 = vsel %vm188, %v358, 0.0
    %v368 = vadd.f32 %v366, %v367
    %v369 = vsel %vm188, %v359, 0.0
    %v370 = vadd.f32 %v368, %v369
    %v371 = vsel %vm188, %v360, 0.0
    %v372 = vadd.f32 %v370, %v371
    %v373 = vsel %vm188, %v361, 0.0
    %v374 = vadd.f32 %v372, %v373
    %v375 = vsel %vm188, %v362, 0.0
    %v376 = vadd.f32 %v374, %v375
    %v377 = vsel %vm188, %v363, 0.0
    %v378 = vadd.f32 %v376, %v377
    %379 = vst.msk [vmem:[#allocation8] sm:$0xf] %vm188, %v378
    %380 = vst.msk [vmem:[#allocation9] sm:$0xf] %vm228, %v300
    %381 = vrot.lane.b32.xlu0 %v301, 1
    %v382 = vpop.permute.xlu0 %381
    %vm384 = vcmask 11272
    %385 = vst.msk [vmem:[#allocation9] sm:$0xf] %vm384, %v382
    %386 = vrot.lane.b32.xlu0 %v302, 2
    %v387 = vpop.permute.xlu0 %386
    %vm389 = vcmask 19472
    %390 = vst.msk [vmem:[#allocation9] sm:$0xf] %vm389, %v387
    %391 = vrot.lane.b32.xlu0 %v303, 3
    %v392 = vpop.permute.xlu0 %391
    %vm394 = vcmask 27672
    %395 = vst.msk [vmem:[#allocation9] sm:$0xf] %vm394, %v392
    %396 = vrot.lane.b32.xlu0 %v304, 4
    %v397 = vpop.permute.xlu0 %396
    %vm399 = vcmask 35872
    %400 = vst.msk [vmem:[#allocation9] sm:$0xf] %vm399, %v397
    %401 = vrot.lane.b32.xlu0 %v305, 5
    %v402 = vpop.permute.xlu0 %401
    %vm404 = vcmask 44072
    %405 = vst.msk [vmem:[#allocation9] sm:$0xf] %vm404, %v402
    %406 = vrot.lane.b32.xlu0 %v306, 6
    %v407 = vpop.permute.xlu0 %406
    %vm409 = vcmask 52272
    %410 = vst.msk [vmem:[#allocation9] sm:$0xf] %vm409, %v407
    %411 = vrot.lane.b32.xlu0 %v307, 7
    %v412 = vpop.permute.xlu0 %411
    %vm414 = vcmask 60472
    %415 = vst.msk [vmem:[#allocation9] sm:$0xf] %vm414, %v412
    // Predicated region
    $region42: #{tpu_custom_call.1} parent=1 // pred_check
      _
    $region43: #{tpu_custom_call.1} parent=1 // pred_check_branch
      %417 = sbr.rel (0) target = $region45
    $region44: #{tpu_custom_call.1} parent=1 // pred_region
      %s419 = ssub.s32 64, 64
      %420 = vsyncadd [#allocation5], %s419
      %s422 = sshll.u32 [#allocation8], 4
      %s423 = int_to_ptr.vmem [resolvable:$true] %s422
      %425 = dma.vmem_to_hbm [thread:$0]  %s423, 64, %s8, [#allocation5]
    $region45: #{tpu_custom_call.1} parent=1 // pred_fallthru
      _
    // Predicated region
    $region46: #{tpu_custom_call.1} parent=1 // pred_check
      _
    $region47: #{tpu_custom_call.1} parent=1 // pred_check_branch
      %427 = sbr.rel (0) target = $region49
    $region48: #{tpu_custom_call.1} parent=1 // pred_region
      %s429 = ssub.s32 64, 64
      %430 = vsyncadd [#allocation10], %s429
      %s432 = sshll.u32 [#allocation9], 4
      %s433 = int_to_ptr.vmem [resolvable:$true] %s432
      %435 = dma.vmem_to_hbm [thread:$0]  %s433, 64, %s9, [#allocation10]
    $region49: #{tpu_custom_call.1} parent=1 // pred_fallthru
      _
    // Predicated region
    $region50: #{tpu_custom_call.1} parent=1 // pred_check
      _
    $region51: #{tpu_custom_call.1} parent=1 // pred_check_branch
      %437 = sbr.rel (0) target = $region53
    $region52: #{tpu_custom_call.1} parent=1 // pred_region
      %438 = dma.done [#allocation5], 64
    $region53: #{tpu_custom_call.1} parent=1 // pred_fallthru
      _
    // Predicated region
    $region54: #{tpu_custom_call.1} parent=1 // pred_check
      _
    $region55: #{tpu_custom_call.1} parent=1 // pred_check_branch
      %440 = sbr.rel (0) target = $region57
    $region56: #{tpu_custom_call.1} parent=1 // pred_region
      %441 = dma.done [#allocation10], 64
    $region57: #{tpu_custom_call.1} parent=1 // pred_fallthru
      _
    %442 = vsyncpa [#allocation4], 1
    %443 = vsyncpa [#allocation7], 1
    %444 = vsyncpa [#allocation5], 1
    %445 = vsyncpa [#allocation10], 1

</llo_original>
